<compile_context>
chip_gen: v7x
topology: tpu7x:2x2x1
jax: 0.10.0
libtpu: 0.0.40
codegen_flags: <defaults>
</compile_context>

<pallas_src>
import jax
import jax.numpy as jnp
from jax.experimental import pallas as pl
from jax.experimental.pallas import tpu as pltpu


def _round_up(n: int, m: int) -> int:
    return ((n + m - 1) // m) * m


def _mlp_kernel(x_ref, w1_ref, b1_ref, w2_ref, b2_ref, w3_ref, b3_ref, o_ref):
    # fc1: bf16 operands on the MXU, f32 accumulate; bias/ReLU epilogue in f32.
    h1 = jnp.dot(x_ref[...], w1_ref[...], preferred_element_type=jnp.float32)
    h1 = jnp.maximum(h1 + b1_ref[...], 0.0)
    # dropout(p=0.2) -> identity in eval mode
    # fc2
    h2 = jnp.dot(h1.astype(w2_ref.dtype), w2_ref[...],
                 preferred_element_type=jnp.float32)
    h2 = jnp.maximum(h2 + b2_ref[...], 0.0)
    # dropout(p=0.2) -> identity in eval mode
    # fc3 (no activation)
    h3 = jnp.dot(h2.astype(w3_ref.dtype), w3_ref[...],
                 preferred_element_type=jnp.float32)
    o_ref[...] = (h3 + b3_ref[...]).astype(o_ref.dtype)


def simple_dl_model_forward(x, params, *, compute_dtype=jnp.bfloat16):
    """SimpleDLModel forward as one fused, batch-tiled Pallas call.

    x: [B, input_size] (or any [B, ...], flattened like x.view(B, -1))
    params: dict with w1 [In,H], b1 [H], w2 [H,H//2], b2 [H//2], w3 [H//2,Out], b3 [Out]
    """
    if x.ndim > 2:
        x = x.reshape(x.shape[0], -1)

    B, in_size = x.shape
    w1, b1 = params["w1"], params["b1"]
    w2, b2 = params["w2"], params["b2"]
    w3, b3 = params["w3"], params["b3"]
    hidden1 = w1.shape[1]
    hidden2 = w2.shape[1]
    out_size = w3.shape[1]

    # Lane-dense feature dims (multiples of 128); sublane-aligned batch tile.
    LANE = 128
    SUBLANE = 8
    in_p = _round_up(in_size, LANE)
    h1_p = _round_up(hidden1, LANE)
    h2_p = _round_up(hidden2, LANE)
    out_p = _round_up(out_size, LANE)

    # Batch tile: fill the MXU M dim; grow up to 512 rows for large batches so
    # per-step grid overhead amortizes, stay small (one tile) for tiny batches.
    if B >= 512:
        tm = 512
    elif B >= 128:
        tm = 128
    else:
        tm = _round_up(max(B, 1), SUBLANE)
    b_p = _round_up(B, tm)

    def pad2(a, rows, cols):
        return jnp.pad(a, ((0, rows - a.shape[0]), (0, cols - a.shape[1])))

    # Zero-padding is semantics-preserving: padded hidden lanes are ReLU(0 + 0) = 0
    # and the corresponding (zero) weight rows contribute nothing downstream.
    x_p = pad2(x, b_p, in_p).astype(compute_dtype)
    w1_p = pad2(w1, in_p, h1_p).astype(compute_dtype)
    w2_p = pad2(w2, h1_p, h2_p).astype(compute_dtype)
    w3_p = pad2(w3, h2_p, out_p).astype(compute_dtype)
    b1_p = jnp.pad(b1, (0, h1_p - hidden1)).reshape(1, h1_p).astype(jnp.float32)
    b2_p = jnp.pad(b2, (0, h2_p - hidden2)).reshape(1, h2_p).astype(jnp.float32)
    b3_p = jnp.pad(b3, (0, out_p - out_size)).reshape(1, out_p).astype(jnp.float32)

    # Weights/biases: same block every grid step -> fetched once, VMEM-resident.
    def resident(a):
        return pl.BlockSpec(a.shape, lambda i: (0,) * a.ndim)

    # Scoped-VMEM budget: resident weights/biases + double-buffered x/out tiles
    # + f32 intermediates, with headroom.  Capped at 64 MiB (v7x per-TC VMEM).
    bpe_c = jnp.dtype(compute_dtype).itemsize
    resident_bytes = (in_p * h1_p + h1_p * h2_p + h2_p * out_p) * bpe_c \
        + (h1_p + h2_p + out_p) * 4
    tile_bytes = 2 * (tm * in_p * bpe_c) + 2 * (tm * out_p * 4) \
        + tm * (h1_p + h2_p + out_p) * 4
    vmem_limit = int(min(max(int((resident_bytes + tile_bytes) * 1.5),
                             32 * 1024 * 1024),
                         64 * 1024 * 1024))

    grid_m = pl.cdiv(b_p, tm)
    flops = 2 * b_p * (in_p * h1_p + h1_p * h2_p + h2_p * out_p)
    bytes_accessed = int(resident_bytes + b_p * in_p * bpe_c + b_p * out_p * 4)

    out_padded = pl.pallas_call(
        _mlp_kernel,
        out_shape=jax.ShapeDtypeStruct((b_p, out_p), jnp.float32),
        grid=(grid_m,),
        in_specs=[
            pl.BlockSpec((tm, in_p), lambda i: (i, 0)),   # x: tiled over batch
            resident(w1_p), resident(b1_p),
            resident(w2_p), resident(b2_p),
            resident(w3_p), resident(b3_p),
        ],
        out_specs=pl.BlockSpec((tm, out_p), lambda i: (i, 0)),
        compiler_params=pltpu.CompilerParams(
            dimension_semantics=("parallel",),  # lets v7x split batch over 2 TCs
            vmem_limit_bytes=vmem_limit,
        ),
        cost_estimate=pl.CostEstimate(
            flops=flops, transcendentals=0, bytes_accessed=bytes_accessed),
    )(x_p, w1_p, b1_p, w2_p, b2_p, w3_p, b3_p)

    return out_padded[:B, :out_size]


def init_params(key, input_size, hidden_size, output_size):
    """Deterministic PyTorch-style (uniform +-1/sqrt(fan_in)) init for the 3 Linears."""
    ks = jax.random.split(key, 6)

    def linear(kw, kb, fan_in, fan_out):
        bound = 1.0 / jnp.sqrt(float(fan_in))
        w = jax.random.uniform(kw, (fan_in, fan_out), jnp.float32, -bound, bound)
        b = jax.random.uniform(kb, (fan_out,), jnp.float32, -bound, bound)
        return w, b

    w1, b1 = linear(ks[0], ks[1], input_size, hidden_size)
    w2, b2 = linear(ks[2], ks[3], hidden_size, hidden_size // 2)
    w3, b3 = linear(ks[4], ks[5], hidden_size // 2, output_size)
    return {"w1": w1, "b1": b1, "w2": w2, "b2": b2, "w3": w3, "b3": b3}


if __name__ == "__main__":
    key = jax.random.PRNGKey(0)
    k_x, k_p = jax.random.split(key)

    # Small demo shapes consistent with the module's forward:
    # NCHW input [2, 4, 16, 16] -> flattened input_size = 1024,
    # hidden_size = 256 (fc2 width 128), output_size = 8.
    B, C, H, W = 2, 4, 16, 16
    input_size = C * H * W
    hidden_size = 256
    output_size = 8

    x = jax.random.normal(k_x, (B, C, H, W), jnp.float32)
    params = init_params(k_p, input_size, hidden_size, output_size)

    forward = jax.jit(simple_dl_model_forward)
    out = forward(x, params)
    jax.block_until_ready(out)

    # Reference in plain f32 JAX (dropout is identity in eval mode). The kernel
    # uses bf16 matmul operands with f32 accumulation, so allow bf16-level error.
    xf = x.reshape(B, -1)
    h1 = jnp.maximum(xf @ params["w1"] + params["b1"], 0.0)
    h2 = jnp.maximum(h1 @ params["w2"] + params["b2"], 0.0)
    ref = h2 @ params["w3"] + params["b3"]

    assert out.shape == (B, output_size)
    assert bool(jnp.all(jnp.isfinite(out)))
    assert jnp.allclose(out, ref, atol=5e-2, rtol=2e-2), (
        float(jnp.max(jnp.abs(out - ref)))
    )

    print("KERNEL_OK")
</pallas_src>

<mosaic_0001>
module attributes {stable_mosaic.version = 11 : i64} {
  func.func @_mlp_kernel(%arg0: i32, %arg1: memref<8x1024xbf16, #tpu.memory_space<vmem>>, %arg2: memref<1024x256xbf16, #tpu.memory_space<vmem>>, %arg3: memref<1x256xf32, #tpu.memory_space<vmem>>, %arg4: memref<256x128xbf16, #tpu.memory_space<vmem>>, %arg5: memref<1x128xf32, #tpu.memory_space<vmem>>, %arg6: memref<128x128xbf16, #tpu.memory_space<vmem>>, %arg7: memref<1x128xf32, #tpu.memory_space<vmem>>, %arg8: memref<8x128xf32, #tpu.memory_space<vmem>>) attributes {dimension_semantics = [#tpu.dimension_semantics<parallel>], iteration_bounds = array<i64: 1>, scalar_prefetch = 0 : i64, scratch_operands = 0 : i64, tpu.core_type = #tpu.core_type<tc>, window_params = [{transform_indices = @transform_0, window_bounds = array<i64: 8, 1024>}, {pipeline_mode = #tpu.pipeline_mode<synchronous>, transform_indices = @transform_1, window_bounds = array<i64: 1024, 256>}, {pipeline_mode = #tpu.pipeline_mode<synchronous>, transform_indices = @transform_2, window_bounds = array<i64: 1, 256>}, {pipeline_mode = #tpu.pipeline_mode<synchronous>, transform_indices = @transform_3, window_bounds = array<i64: 256, 128>}, {pipeline_mode = #tpu.pipeline_mode<synchronous>, transform_indices = @transform_4, window_bounds = array<i64: 1, 128>}, {pipeline_mode = #tpu.pipeline_mode<synchronous>, transform_indices = @transform_5, window_bounds = array<i64: 128, 128>}, {pipeline_mode = #tpu.pipeline_mode<synchronous>, transform_indices = @transform_6, window_bounds = array<i64: 1, 128>}, {transform_indices = @transform_7, window_bounds = array<i64: 8, 128>}]} {
    %c0 = arith.constant 0 : index
    %c0_0 = arith.constant 0 : index
    %0 = vector.load %arg1[%c0, %c0_0] : memref<8x1024xbf16, #tpu.memory_space<vmem>>, vector<8x1024xbf16>
    %c0_1 = arith.constant 0 : index
    %c0_2 = arith.constant 0 : index
    %1 = vector.load %arg2[%c0_1, %c0_2] : memref<1024x256xbf16, #tpu.memory_space<vmem>>, vector<1024x256xbf16>
    %cst = arith.constant dense<0.000000e+00> : vector<8x256xf32>
    %2 = tpu.matmul %0, %1, %cst {dimension_numbers = #tpu.dot_dimension_numbers<[1], [0], [0], [1], [0, 0, 1, 1], [], []>} : vector<8x1024xbf16>, vector<1024x256xbf16>, vector<8x256xf32> -> vector<8x256xf32>
    %c0_3 = arith.constant 0 : index
    %c0_4 = arith.constant 0 : index
    %3 = vector.load %arg3[%c0_3, %c0_4] : memref<1x256xf32, #tpu.memory_space<vmem>>, vector<1x256xf32>
    %4 = vector.broadcast %3 : vector<1x256xf32> to vector<8x256xf32>
    %5 = arith.addf %2, %4 : vector<8x256xf32>
    %cst_5 = arith.constant 0.000000e+00 : f32
    %6 = vector.broadcast %cst_5 : f32 to vector<8x256xf32>
    %7 = arith.maximumf %5, %6 : vector<8x256xf32>
    %8 = arith.truncf %7 : vector<8x256xf32> to vector<8x256xbf16>
    %c0_6 = arith.constant 0 : index
    %c0_7 = arith.constant 0 : index
    %9 = vector.load %arg4[%c0_6, %c0_7] : memref<256x128xbf16, #tpu.memory_space<vmem>>, vector<256x128xbf16>
    %cst_8 = arith.constant dense<0.000000e+00> : vector<8x128xf32>
    %10 = tpu.matmul %8, %9, %cst_8 {dimension_numbers = #tpu.dot_dimension_numbers<[1], [0], [0], [1], [0, 0, 1, 1], [], []>} : vector<8x256xbf16>, vector<256x128xbf16>, vector<8x128xf32> -> vector<8x128xf32>
    %c0_9 = arith.constant 0 : index
    %c0_10 = arith.constant 0 : index
    %11 = vector.load %arg5[%c0_9, %c0_10] : memref<1x128xf32, #tpu.memory_space<vmem>>, vector<1x128xf32>
    %12 = vector.broadcast %11 : vector<1x128xf32> to vector<8x128xf32>
    %13 = arith.addf %10, %12 : vector<8x128xf32>
    %cst_11 = arith.constant 0.000000e+00 : f32
    %14 = vector.broadcast %cst_11 : f32 to vector<8x128xf32>
    %15 = arith.maximumf %13, %14 : vector<8x128xf32>
    %16 = arith.truncf %15 : vector<8x128xf32> to vector<8x128xbf16>
    %c0_12 = arith.constant 0 : index
    %c0_13 = arith.constant 0 : index
    %17 = vector.load %arg6[%c0_12, %c0_13] : memref<128x128xbf16, #tpu.memory_space<vmem>>, vector<128x128xbf16>
    %cst_14 = arith.constant dense<0.000000e+00> : vector<8x128xf32>
    %18 = tpu.matmul %16, %17, %cst_14 {dimension_numbers = #tpu.dot_dimension_numbers<[1], [0], [0], [1], [0, 0, 1, 1], [], []>} : vector<8x128xbf16>, vector<128x128xbf16>, vector<8x128xf32> -> vector<8x128xf32>
    %c0_15 = arith.constant 0 : index
    %c0_16 = arith.constant 0 : index
    %19 = vector.load %arg7[%c0_15, %c0_16] : memref<1x128xf32, #tpu.memory_space<vmem>>, vector<1x128xf32>
    %20 = vector.broadcast %19 : vector<1x128xf32> to vector<8x128xf32>
    %21 = arith.addf %18, %20 : vector<8x128xf32>
    %c0_17 = arith.constant 0 : index
    %c0_18 = arith.constant 0 : index
    %22 = vector.load %arg8[%c0_17, %c0_18] : memref<8x128xf32, #tpu.memory_space<vmem>>, vector<8x128xf32>
    tpu.vector_store %arg8[%c0_17, %c0_18], %21 {strides = array<i32>} : memref<8x128xf32, #tpu.memory_space<vmem>>, vector<8x128xf32>,
    return
  }
  func.func @transform_0(%arg0: i32) -> (i32, i32) {
    %c0_i32 = arith.constant 0 : i32
    %c0_i32_0 = arith.constant 0 : i32
    return %arg0, %c0_i32 : i32, i32
  }
  func.func @transform_1(%arg0: i32) -> (i32, i32) {
    %c0_i32 = arith.constant 0 : i32
    %c0_i32_0 = arith.constant 0 : i32
    %c0_i32_1 = arith.constant 0 : i32
    return %c0_i32, %c0_i32_0 : i32, i32
  }
  func.func @transform_2(%arg0: i32) -> (i32, i32) {
    %c0_i32 = arith.constant 0 : i32
    %c0_i32_0 = arith.constant 0 : i32
    %c0_i32_1 = arith.constant 0 : i32
    return %c0_i32, %c0_i32_0 : i32, i32
  }
  func.func @transform_3(%arg0: i32) -> (i32, i32) {
    %c0_i32 = arith.constant 0 : i32
    %c0_i32_0 = arith.constant 0 : i32
    %c0_i32_1 = arith.constant 0 : i32
    return %c0_i32, %c0_i32_0 : i32, i32
  }
  func.func @transform_4(%arg0: i32) -> (i32, i32) {
    %c0_i32 = arith.constant 0 : i32
    %c0_i32_0 = arith.constant 0 : i32
    %c0_i32_1 = arith.constant 0 : i32
    return %c0_i32, %c0_i32_0 : i32, i32
  }
  func.func @transform_5(%arg0: i32) -> (i32, i32) {
    %c0_i32 = arith.constant 0 : i32
    %c0_i32_0 = arith.constant 0 : i32
    %c0_i32_1 = arith.constant 0 : i32
    return %c0_i32, %c0_i32_0 : i32, i32
  }
  func.func @transform_6(%arg0: i32) -> (i32, i32) {
    %c0_i32 = arith.constant 0 : i32
    %c0_i32_0 = arith.constant 0 : i32
    %c0_i32_1 = arith.constant 0 : i32
    return %c0_i32, %c0_i32_0 : i32, i32
  }
  func.func @transform_7(%arg0: i32) -> (i32, i32) {
    %c0_i32 = arith.constant 0 : i32
    %c0_i32_0 = arith.constant 0 : i32
    return %arg0, %c0_i32 : i32, i32
  }
}

</mosaic_0001>

<llo_original>
// kernel: simple_dl_model_forward.1
$region0: #{simple_dl_model_forward.1}
  #allocation0 [shape = 'u32[]', space=smem, size = 0x4, offset = 0x4, fixed_abs, tag = 'smem constant byte address 0x4 - core index']
  #allocation1 [shape = 'u32[144,128]{1,0:T(1,128)}', space=vmem, size = 0x12000, scoped, tag = 'internal scratch']
  %s0 = inlined_call_operand.vmem [shape: bf16[8,1024], index: 0, kind: input, shape index: {}]
  %s1 = inlined_call_operand.vmem [shape: bf16[1024,256], index: 1, kind: input, shape index: {}]
  %s2 = inlined_call_operand.vmem [shape: f32[1,256], index: 2, kind: input, shape index: {}]
  %s3 = inlined_call_operand.vmem [shape: bf16[256,128], index: 3, kind: input, shape index: {}]
  %s4 = inlined_call_operand.vmem [shape: f32[1,128], index: 4, kind: input, shape index: {}]
  %s5 = inlined_call_operand.vmem [shape: bf16[128,128], index: 5, kind: input, shape index: {}]
  %s6 = inlined_call_operand.vmem [shape: f32[1,128], index: 6, kind: input, shape index: {}]
  %s7 = inlined_call_operand.vmem [shape: f32[8,128], index: 7, kind: output, shape index: {}]
  %s8 = sld [smem:[#allocation0]]
  $region38: #{simple_dl_model_forward.1} parent=0
    _
  %s10 = ssub.s32 1, %s8
  %s11 = scalar_select 0, %s10, %s8
  // Predicated region
  $region2: #{simple_dl_model_forward.1} parent=0 // pred_check
    _
  $region3: #{simple_dl_model_forward.1} parent=0 // pred_check_branch
    %13 = sbr.rel (0) target = $region5
  $region4: #{simple_dl_model_forward.1} parent=0 // pred_region
    _
  $region5: #{simple_dl_model_forward.1} parent=0 // pred_fallthru
    _
  // Predicated region
  $region6: #{simple_dl_model_forward.1} parent=0 // pred_check
    _
  $region7: #{simple_dl_model_forward.1} parent=0 // pred_check_branch
    %15 = sbr.rel (0) target = $region9
  $region8: #{simple_dl_model_forward.1} parent=0 // pred_region
    _
  $region9: #{simple_dl_model_forward.1} parent=0 // pred_fallthru
    _
  // Predicated region
  $region10: #{simple_dl_model_forward.1} parent=0 // pred_check
    _
  $region11: #{simple_dl_model_forward.1} parent=0 // pred_check_branch
    %17 = sbr.rel (0) target = $region13
  $region12: #{simple_dl_model_forward.1} parent=0 // pred_region
    _
  $region13: #{simple_dl_model_forward.1} parent=0 // pred_fallthru
    _
  // Predicated region
  $region14: #{simple_dl_model_forward.1} parent=0 // pred_check
    _
  $region15: #{simple_dl_model_forward.1} parent=0 // pred_check_branch
    %19 = sbr.rel (0) target = $region17
  $region16: #{simple_dl_model_forward.1} parent=0 // pred_region
    _
  $region17: #{simple_dl_model_forward.1} parent=0 // pred_fallthru
    _
  // Predicated region
  $region18: #{simple_dl_model_forward.1} parent=0 // pred_check
    _
  $region19: #{simple_dl_model_forward.1} parent=0 // pred_check_branch
    %21 = sbr.rel (0) target = $region21
  $region20: #{simple_dl_model_forward.1} parent=0 // pred_region
    _
  $region21: #{simple_dl_model_forward.1} parent=0 // pred_fallthru
    _
  // Predicated region
  $region22: #{simple_dl_model_forward.1} parent=0 // pred_check
    _
  $region23: #{simple_dl_model_forward.1} parent=0 // pred_check_branch
    %23 = sbr.rel (0) target = $region25
  $region24: #{simple_dl_model_forward.1} parent=0 // pred_region
    _
  $region25: #{simple_dl_model_forward.1} parent=0 // pred_fallthru
    _
  // Predicated region
  $region26: #{simple_dl_model_forward.1} parent=0 // pred_check
    _
  $region27: #{simple_dl_model_forward.1} parent=0 // pred_check_branch
    %25 = sbr.rel (0) target = $region29
  $region28: #{simple_dl_model_forward.1} parent=0 // pred_region
    _
  $region29: #{simple_dl_model_forward.1} parent=0 // pred_fallthru
    _
  %v27 = vld [vmem:[%s0] sm:$0xff]
  %v28 = vld [vmem:[%s0 + $0x8] sm:$0xff]
  %v29 = vld [vmem:[%s0 + $0x10] sm:$0xff]
  %v30 = vld [vmem:[%s0 + $0x18] sm:$0xff]
  %v31 = vld [vmem:[%s1] sm:$0xff]
  %v32 = vld [vmem:[%s1 + $0x8] sm:$0xff]
  %v33 = vld [vmem:[%s1 + $0x10] sm:$0xff]
  %v34 = vld [vmem:[%s1 + $0x18] sm:$0xff]
  %v35 = vld [vmem:[%s1 + $0x20] sm:$0xff]
  %v36 = vld [vmem:[%s1 + $0x28] sm:$0xff]
  %v37 = vld [vmem:[%s1 + $0x30] sm:$0xff]
  %v38 = vld [vmem:[%s1 + $0x38] sm:$0xff]
  %v39 = vld [vmem:[%s1 + $0x40] sm:$0xff]
  %v40 = vld [vmem:[%s1 + $0x48] sm:$0xff]
  %v41 = vld [vmem:[%s1 + $0x50] sm:$0xff]
  %v42 = vld [vmem:[%s1 + $0x58] sm:$0xff]
  %v43 = vld [vmem:[%s1 + $0x60] sm:$0xff]
  %v44 = vld [vmem:[%s1 + $0x68] sm:$0xff]
  %v45 = vld [vmem:[%s1 + $0x70] sm:$0xff]
  %v46 = vld [vmem:[%s1 + $0x78] sm:$0xff]
  %v47 = vld [vmem:[%s1 + $0x80] sm:$0xff]
  %v48 = vld [vmem:[%s1 + $0x88] sm:$0xff]
  %v49 = vld [vmem:[%s1 + $0x90] sm:$0xff]
  %v50 = vld [vmem:[%s1 + $0x98] sm:$0xff]
  %v51 = vld [vmem:[%s1 + $0xa0] sm:$0xff]
  %v52 = vld [vmem:[%s1 + $0xa8] sm:$0xff]
  %v53 = vld [vmem:[%s1 + $0xb0] sm:$0xff]
  %v54 = vld [vmem:[%s1 + $0xb8] sm:$0xff]
  %v55 = vld [vmem:[%s1 + $0xc0] sm:$0xff]
  %v56 = vld [vmem:[%s1 + $0xc8] sm:$0xff]
  %v57 = vld [vmem:[%s1 + $0xd0] sm:$0xff]
  %v58 = vld [vmem:[%s1 + $0xd8] sm:$0xff]
  %v59 = vld [vmem:[%s1 + $0xe0] sm:$0xff]
  %v60 = vld [vmem:[%s1 + $0xe8] sm:$0xff]
  %v61 = vld [vmem:[%s1 + $0xf0] sm:$0xff]
  %v62 = vld [vmem:[%s1 + $0xf8] sm:$0xff]
  %v63 = vld [vmem:[%s1 + $0x100] sm:$0xff]
  %v64 = vld [vmem:[%s1 + $0x108] sm:$0xff]
  %v65 = vld [vmem:[%s1 + $0x110] sm:$0xff]
  %v66 = vld [vmem:[%s1 + $0x118] sm:$0xff]
  %v67 = vld [vmem:[%s1 + $0x120] sm:$0xff]
  %v68 = vld [vmem:[%s1 + $0x128] sm:$0xff]
  %v69 = vld [vmem:[%s1 + $0x130] sm:$0xff]
  %v70 = vld [vmem:[%s1 + $0x138] sm:$0xff]
  %v71 = vld [vmem:[%s1 + $0x140] sm:$0xff]
  %v72 = vld [vmem:[%s1 + $0x148] sm:$0xff]
  %v73 = vld [vmem:[%s1 + $0x150] sm:$0xff]
  %v74 = vld [vmem:[%s1 + $0x158] sm:$0xff]
  %v75 = vld [vmem:[%s1 + $0x160] sm:$0xff]
  %v76 = vld [vmem:[%s1 + $0x168] sm:$0xff]
  %v77 = vld [vmem:[%s1 + $0x170] sm:$0xff]
  %v78 = vld [vmem:[%s1 + $0x178] sm:$0xff]
  %v79 = vld [vmem:[%s1 + $0x180] sm:$0xff]
  %v80 = vld [vmem:[%s1 + $0x188] sm:$0xff]
  %v81 = vld [vmem:[%s1 + $0x190] sm:$0xff]
  %v82 = vld [vmem:[%s1 + $0x198] sm:$0xff]
  %v83 = vld [vmem:[%s1 + $0x1a0] sm:$0xff]
  %v84 = vld [vmem:[%s1 + $0x1a8] sm:$0xff]
  %v85 = vld [vmem:[%s1 + $0x1b0] sm:$0xff]
  %v86 = vld [vmem:[%s1 + $0x1b8] sm:$0xff]
  %v87 = vld [vmem:[%s1 + $0x1c0] sm:$0xff]
  %v88 = vld [vmem:[%s1 + $0x1c8] sm:$0xff]
  %v89 = vld [vmem:[%s1 + $0x1d0] sm:$0xff]
  %v90 = vld [vmem:[%s1 + $0x1d8] sm:$0xff]
  %v91 = vld [vmem:[%s1 + $0x1e0] sm:$0xff]
  %v92 = vld [vmem:[%s1 + $0x1e8] sm:$0xff]
  %v93 = vld [vmem:[%s1 + $0x1f0] sm:$0xff]
  %v94 = vld [vmem:[%s1 + $0x1f8] sm:$0xff]
  %v95 = vld [vmem:[%s1 + $0x200] sm:$0xff]
  %v96 = vld [vmem:[%s1 + $0x208] sm:$0xff]
  %v97 = vld [vmem:[%s1 + $0x210] sm:$0xff]
  %v98 = vld [vmem:[%s1 + $0x218] sm:$0xff]
  %v99 = vld [vmem:[%s1 + $0x220] sm:$0xff]
  %v100 = vld [vmem:[%s1 + $0x228] sm:$0xff]
  %v101 = vld [vmem:[%s1 + $0x230] sm:$0xff]
  %v102 = vld [vmem:[%s1 + $0x238] sm:$0xff]
  %v103 = vld [vmem:[%s1 + $0x240] sm:$0xff]
  %v104 = vld [vmem:[%s1 + $0x248] sm:$0xff]
  %v105 = vld [vmem:[%s1 + $0x250] sm:$0xff]
  %v106 = vld [vmem:[%s1 + $0x258] sm:$0xff]
  %v107 = vld [vmem:[%s1 + $0x260] sm:$0xff]
  %v108 = vld [vmem:[%s1 + $0x268] sm:$0xff]
  %v109 = vld [vmem:[%s1 + $0x270] sm:$0xff]
  %v110 = vld [vmem:[%s1 + $0x278] sm:$0xff]
  %v111 = vld [vmem:[%s1 + $0x280] sm:$0xff]
  %v112 = vld [vmem:[%s1 + $0x288] sm:$0xff]
  %v113 = vld [vmem:[%s1 + $0x290] sm:$0xff]
  %v114 = vld [vmem:[%s1 + $0x298] sm:$0xff]
  %v115 = vld [vmem:[%s1 + $0x2a0] sm:$0xff]
  %v116 = vld [vmem:[%s1 + $0x2a8] sm:$0xff]
  %v117 = vld [vmem:[%s1 + $0x2b0] sm:$0xff]
  %v118 = vld [vmem:[%s1 + $0x2b8] sm:$0xff]
  %v119 = vld [vmem:[%s1 + $0x2c0] sm:$0xff]
  %v120 = vld [vmem:[%s1 + $0x2c8] sm:$0xff]
  %v121 = vld [vmem:[%s1 + $0x2d0] sm:$0xff]
  %v122 = vld [vmem:[%s1 + $0x2d8] sm:$0xff]
  %v123 = vld [vmem:[%s1 + $0x2e0] sm:$0xff]
  %v124 = vld [vmem:[%s1 + $0x2e8] sm:$0xff]
  %v125 = vld [vmem:[%s1 + $0x2f0] sm:$0xff]
  %v126 = vld [vmem:[%s1 + $0x2f8] sm:$0xff]
  %v127 = vld [vmem:[%s1 + $0x300] sm:$0xff]
  %v128 = vld [vmem:[%s1 + $0x308] sm:$0xff]
  %v129 = vld [vmem:[%s1 + $0x310] sm:$0xff]
  %v130 = vld [vmem:[%s1 + $0x318] sm:$0xff]
  %v131 = vld [vmem:[%s1 + $0x320] sm:$0xff]
  %v132 = vld [vmem:[%s1 + $0x328] sm:$0xff]
  %v133 = vld [vmem:[%s1 + $0x330] sm:$0xff]
  %v134 = vld [vmem:[%s1 + $0x338] sm:$0xff]
  %v135 = vld [vmem:[%s1 + $0x340] sm:$0xff]
  %v136 = vld [vmem:[%s1 + $0x348] sm:$0xff]
  %v137 = vld [vmem:[%s1 + $0x350] sm:$0xff]
  %v138 = vld [vmem:[%s1 + $0x358] sm:$0xff]
  %v139 = vld [vmem:[%s1 + $0x360] sm:$0xff]
  %v140 = vld [vmem:[%s1 + $0x368] sm:$0xff]
  %v141 = vld [vmem:[%s1 + $0x370] sm:$0xff]
  %v142 = vld [vmem:[%s1 + $0x378] sm:$0xff]
  %v143 = vld [vmem:[%s1 + $0x380] sm:$0xff]
  %v144 = vld [vmem:[%s1 + $0x388] sm:$0xff]
  %v145 = vld [vmem:[%s1 + $0x390] sm:$0xff]
  %v146 = vld [vmem:[%s1 + $0x398] sm:$0xff]
  %v147 = vld [vmem:[%s1 + $0x3a0] sm:$0xff]
  %v148 = vld [vmem:[%s1 + $0x3a8] sm:$0xff]
  %v149 = vld [vmem:[%s1 + $0x3b0] sm:$0xff]
  %v150 = vld [vmem:[%s1 + $0x3b8] sm:$0xff]
  %v151 = vld [vmem:[%s1 + $0x3c0] sm:$0xff]
  %v152 = vld [vmem:[%s1 + $0x3c8] sm:$0xff]
  %v153 = vld [vmem:[%s1 + $0x3d0] sm:$0xff]
  %v154 = vld [vmem:[%s1 + $0x3d8] sm:$0xff]
  %v155 = vld [vmem:[%s1 + $0x3e0] sm:$0xff]
  %v156 = vld [vmem:[%s1 + $0x3e8] sm:$0xff]
  %v157 = vld [vmem:[%s1 + $0x3f0] sm:$0xff]
  %v158 = vld [vmem:[%s1 + $0x3f8] sm:$0xff]
  %v159 = vld [vmem:[%s2] sm:$0x3]
  %v161 = vlaneseq
  %v162 = vshrl.u32 %v161, 7
  %v163 = vsub.s32 0, %v162
  %v164 = vrot.slane %v159, %v163
  %v165 = vlaneseq
  %v166 = vshrl.u32 %v165, 7
  %v167 = vsub.s32 1, %v166
  %v168 = vrot.slane %v159, %v167
  %v175 = vunpack.c.l.b16 %v27
  %v176 = vunpack.c.h.b16 %v27
  %v177 = vunpack.c.l.b16 %v28
  %v178 = vunpack.c.h.b16 %v28
  %v179 = vunpack.c.l.b16 %v29
  %v180 = vunpack.c.h.b16 %v29
  %v181 = vunpack.c.l.b16 %v30
  %v182 = vunpack.c.h.b16 %v30
  %v183 = vpack.c.b16 %v175, %v175
  %v184 = vpack.c.b16 %v176, %v176
  %v185 = vpack.c.b16 %v177, %v177
  %v186 = vpack.c.b16 %v178, %v178
  %v187 = vpack.c.b16 %v179, %v179
  %v188 = vpack.c.b16 %v180, %v180
  %v189 = vpack.c.b16 %v181, %v181
  %v190 = vpack.c.b16 %v182, %v182
  %v327 = vunpack.c.l.b16 %v31
  %v328 = vunpack.c.h.b16 %v31
  %v329 = vunpack.c.l.b16 %v32
  %v330 = vunpack.c.h.b16 %v32
  %v331 = vunpack.c.l.b16 %v33
  %v332 = vunpack.c.h.b16 %v33
  %v333 = vunpack.c.l.b16 %v34
  %v334 = vunpack.c.h.b16 %v34
  %v335 = vunpack.c.l.b16 %v35
  %v336 = vunpack.c.h.b16 %v35
  %v337 = vunpack.c.l.b16 %v36
  %v338 = vunpack.c.h.b16 %v36
  %v339 = vunpack.c.l.b16 %v37
  %v340 = vunpack.c.h.b16 %v37
  %v341 = vunpack.c.l.b16 %v38
  %v342 = vunpack.c.h.b16 %v38
  %v343 = vunpack.c.l.b16 %v39
  %v344 = vunpack.c.h.b16 %v39
  %v345 = vunpack.c.l.b16 %v40
  %v346 = vunpack.c.h.b16 %v40
  %v347 = vunpack.c.l.b16 %v41
  %v348 = vunpack.c.h.b16 %v41
  %v349 = vunpack.c.l.b16 %v42
  %v350 = vunpack.c.h.b16 %v42
  %v351 = vunpack.c.l.b16 %v43
  %v352 = vunpack.c.h.b16 %v43
  %v353 = vunpack.c.l.b16 %v44
  %v354 = vunpack.c.h.b16 %v44
  %v355 = vunpack.c.l.b16 %v45
  %v356 = vunpack.c.h.b16 %v45
  %v357 = vunpack.c.l.b16 %v46
  %v358 = vunpack.c.h.b16 %v46
  %v359 = vunpack.c.l.b16 %v47
  %v360 = vunpack.c.h.b16 %v47
  %v361 = vunpack.c.l.b16 %v48
  %v362 = vunpack.c.h.b16 %v48
  %v363 = vunpack.c.l.b16 %v49
  %v364 = vunpack.c.h.b16 %v49
  %v365 = vunpack.c.l.b16 %v50
  %v366 = vunpack.c.h.b16 %v50
  %v367 = vunpack.c.l.b16 %v51
  %v368 = vunpack.c.h.b16 %v51
  %v369 = vunpack.c.l.b16 %v52
  %v370 = vunpack.c.h.b16 %v52
  %v371 = vunpack.c.l.b16 %v53
  %v372 = vunpack.c.h.b16 %v53
  %v373 = vunpack.c.l.b16 %v54
  %v374 = vunpack.c.h.b16 %v54
  %v375 = vunpack.c.l.b16 %v55
  %v376 = vunpack.c.h.b16 %v55
  %v377 = vunpack.c.l.b16 %v56
  %v378 = vunpack.c.h.b16 %v56
  %v379 = vunpack.c.l.b16 %v57
  %v380 = vunpack.c.h.b16 %v57
  %v381 = vunpack.c.l.b16 %v58
  %v382 = vunpack.c.h.b16 %v58
  %v383 = vunpack.c.l.b16 %v59
  %v384 = vunpack.c.h.b16 %v59
  %v385 = vunpack.c.l.b16 %v60
  %v386 = vunpack.c.h.b16 %v60
  %v387 = vunpack.c.l.b16 %v61
  %v388 = vunpack.c.h.b16 %v61
  %v389 = vunpack.c.l.b16 %v62
  %v390 = vunpack.c.h.b16 %v62
  %v391 = vunpack.c.l.b16 %v63
  %v392 = vunpack.c.h.b16 %v63
  %v393 = vunpack.c.l.b16 %v64
  %v394 = vunpack.c.h.b16 %v64
  %v395 = vunpack.c.l.b16 %v65
  %v396 = vunpack.c.h.b16 %v65
  %v397 = vunpack.c.l.b16 %v66
  %v398 = vunpack.c.h.b16 %v66
  %v399 = vunpack.c.l.b16 %v67
  %v400 = vunpack.c.h.b16 %v67
  %v401 = vunpack.c.l.b16 %v68
  %v402 = vunpack.c.h.b16 %v68
  %v403 = vunpack.c.l.b16 %v69
  %v404 = vunpack.c.h.b16 %v69
  %v405 = vunpack.c.l.b16 %v70
  %v406 = vunpack.c.h.b16 %v70
  %v407 = vunpack.c.l.b16 %v71
  %v408 = vunpack.c.h.b16 %v71
  %v409 = vunpack.c.l.b16 %v72
  %v410 = vunpack.c.h.b16 %v72
  %v411 = vunpack.c.l.b16 %v73
  %v412 = vunpack.c.h.b16 %v73
  %v413 = vunpack.c.l.b16 %v74
  %v414 = vunpack.c.h.b16 %v74
  %v415 = vunpack.c.l.b16 %v75
  %v416 = vunpack.c.h.b16 %v75
  %v417 = vunpack.c.l.b16 %v76
  %v418 = vunpack.c.h.b16 %v76
  %v419 = vunpack.c.l.b16 %v77
  %v420 = vunpack.c.h.b16 %v77
  %v421 = vunpack.c.l.b16 %v78
  %v422 = vunpack.c.h.b16 %v78
  %v423 = vunpack.c.l.b16 %v79
  %v424 = vunpack.c.h.b16 %v79
  %v425 = vunpack.c.l.b16 %v80
  %v426 = vunpack.c.h.b16 %v80
  %v427 = vunpack.c.l.b16 %v81
  %v428 = vunpack.c.h.b16 %v81
  %v429 = vunpack.c.l.b16 %v82
  %v430 = vunpack.c.h.b16 %v82
  %v431 = vunpack.c.l.b16 %v83
  %v432 = vunpack.c.h.b16 %v83
  %v433 = vunpack.c.l.b16 %v84
  %v434 = vunpack.c.h.b16 %v84
  %v435 = vunpack.c.l.b16 %v85
  %v436 = vunpack.c.h.b16 %v85
  %v437 = vunpack.c.l.b16 %v86
  %v438 = vunpack.c.h.b16 %v86
  %v439 = vunpack.c.l.b16 %v87
  %v440 = vunpack.c.h.b16 %v87
  %v441 = vunpack.c.l.b16 %v88
  %v442 = vunpack.c.h.b16 %v88
  %v443 = vunpack.c.l.b16 %v89
  %v444 = vunpack.c.h.b16 %v89
  %v445 = vunpack.c.l.b16 %v90
  %v446 = vunpack.c.h.b16 %v90
  %v447 = vunpack.c.l.b16 %v91
  %v448 = vunpack.c.h.b16 %v91
  %v449 = vunpack.c.l.b16 %v92
  %v450 = vunpack.c.h.b16 %v92
  %v451 = vunpack.c.l.b16 %v93
  %v452 = vunpack.c.h.b16 %v93
  %v453 = vunpack.c.l.b16 %v94
  %v454 = vunpack.c.h.b16 %v94
  %v455 = vunpack.c.l.b16 %v95
  %v456 = vunpack.c.h.b16 %v95
  %v457 = vunpack.c.l.b16 %v96
  %v458 = vunpack.c.h.b16 %v96
  %v459 = vunpack.c.l.b16 %v97
  %v460 = vunpack.c.h.b16 %v97
  %v461 = vunpack.c.l.b16 %v98
  %v462 = vunpack.c.h.b16 %v98
  %v463 = vunpack.c.l.b16 %v99
  %v464 = vunpack.c.h.b16 %v99
  %v465 = vunpack.c.l.b16 %v100
  %v466 = vunpack.c.h.b16 %v100
  %v467 = vunpack.c.l.b16 %v101
  %v468 = vunpack.c.h.b16 %v101
  %v469 = vunpack.c.l.b16 %v102
  %v470 = vunpack.c.h.b16 %v102
  %v471 = vunpack.c.l.b16 %v103
  %v472 = vunpack.c.h.b16 %v103
  %v473 = vunpack.c.l.b16 %v104
  %v474 = vunpack.c.h.b16 %v104
  %v475 = vunpack.c.l.b16 %v105
  %v476 = vunpack.c.h.b16 %v105
  %v477 = vunpack.c.l.b16 %v106
  %v478 = vunpack.c.h.b16 %v106
  %v479 = vunpack.c.l.b16 %v107
  %v480 = vunpack.c.h.b16 %v107
  %v481 = vunpack.c.l.b16 %v108
  %v482 = vunpack.c.h.b16 %v108
  %v483 = vunpack.c.l.b16 %v109
  %v484 = vunpack.c.h.b16 %v109
  %v485 = vunpack.c.l.b16 %v110
  %v486 = vunpack.c.h.b16 %v110
  %v487 = vunpack.c.l.b16 %v111
  %v488 = vunpack.c.h.b16 %v111
  %v489 = vunpack.c.l.b16 %v112
  %v490 = vunpack.c.h.b16 %v112
  %v491 = vunpack.c.l.b16 %v113
  %v492 = vunpack.c.h.b16 %v113
  %v493 = vunpack.c.l.b16 %v114
  %v494 = vunpack.c.h.b16 %v114
  %v495 = vunpack.c.l.b16 %v115
  %v496 = vunpack.c.h.b16 %v115
  %v497 = vunpack.c.l.b16 %v116
  %v498 = vunpack.c.h.b16 %v116
  %v499 = vunpack.c.l.b16 %v117
  %v500 = vunpack.c.h.b16 %v117
  %v501 = vunpack.c.l.b16 %v118
  %v502 = vunpack.c.h.b16 %v118
  %v503 = vunpack.c.l.b16 %v119
  %v504 = vunpack.c.h.b16 %v119
  %v505 = vunpack.c.l.b16 %v120
  %v506 = vunpack.c.h.b16 %v120
  %v507 = vunpack.c.l.b16 %v121
  %v508 = vunpack.c.h.b16 %v121
  %v509 = vunpack.c.l.b16 %v122
  %v510 = vunpack.c.h.b16 %v122
  %v511 = vunpack.c.l.b16 %v123
  %v512 = vunpack.c.h.b16 %v123
  %v513 = vunpack.c.l.b16 %v124
  %v514 = vunpack.c.h.b16 %v124
  %v515 = vunpack.c.l.b16 %v125
  %v516 = vunpack.c.h.b16 %v125
  %v517 = vunpack.c.l.b16 %v126
  %v518 = vunpack.c.h.b16 %v126
  %v519 = vunpack.c.l.b16 %v127
  %v520 = vunpack.c.h.b16 %v127
  %v521 = vunpack.c.l.b16 %v128
  %v522 = vunpack.c.h.b16 %v128
  %v523 = vunpack.c.l.b16 %v129
  %v524 = vunpack.c.h.b16 %v129
  %v525 = vunpack.c.l.b16 %v130
  %v526 = vunpack.c.h.b16 %v130
  %v527 = vunpack.c.l.b16 %v131
  %v528 = vunpack.c.h.b16 %v131
  %v529 = vunpack.c.l.b16 %v132
  %v530 = vunpack.c.h.b16 %v132
  %v531 = vunpack.c.l.b16 %v133
  %v532 = vunpack.c.h.b16 %v133
  %v533 = vunpack.c.l.b16 %v134
  %v534 = vunpack.c.h.b16 %v134
  %v535 = vunpack.c.l.b16 %v135
  %v536 = vunpack.c.h.b16 %v135
  %v537 = vunpack.c.l.b16 %v136
  %v538 = vunpack.c.h.b16 %v136
  %v539 = vunpack.c.l.b16 %v137
  %v540 = vunpack.c.h.b16 %v137
  %v541 = vunpack.c.l.b16 %v138
  %v542 = vunpack.c.h.b16 %v138
  %v543 = vunpack.c.l.b16 %v139
  %v544 = vunpack.c.h.b16 %v139
  %v545 = vunpack.c.l.b16 %v140
  %v546 = vunpack.c.h.b16 %v140
  %v547 = vunpack.c.l.b16 %v141
  %v548 = vunpack.c.h.b16 %v141
  %v549 = vunpack.c.l.b16 %v142
  %v550 = vunpack.c.h.b16 %v142
  %v551 = vunpack.c.l.b16 %v143
  %v552 = vunpack.c.h.b16 %v143
  %v553 = vunpack.c.l.b16 %v144
  %v554 = vunpack.c.h.b16 %v144
  %v555 = vunpack.c.l.b16 %v145
  %v556 = vunpack.c.h.b16 %v145
  %v557 = vunpack.c.l.b16 %v146
  %v558 = vunpack.c.h.b16 %v146
  %v559 = vunpack.c.l.b16 %v147
  %v560 = vunpack.c.h.b16 %v147
  %v561 = vunpack.c.l.b16 %v148
  %v562 = vunpack.c.h.b16 %v148
  %v563 = vunpack.c.l.b16 %v149
  %v564 = vunpack.c.h.b16 %v149
  %v565 = vunpack.c.l.b16 %v150
  %v566 = vunpack.c.h.b16 %v150
  %v567 = vunpack.c.l.b16 %v151
  %v568 = vunpack.c.h.b16 %v151
  %v569 = vunpack.c.l.b16 %v152
  %v570 = vunpack.c.h.b16 %v152
  %v571 = vunpack.c.l.b16 %v153
  %v572 = vunpack.c.h.b16 %v153
  %v573 = vunpack.c.l.b16 %v154
  %v574 = vunpack.c.h.b16 %v154
  %v575 = vunpack.c.l.b16 %v155
  %v576 = vunpack.c.h.b16 %v155
  %v577 = vunpack.c.l.b16 %v156
  %v578 = vunpack.c.h.b16 %v156
  %v579 = vunpack.c.l.b16 %v157
  %v580 = vunpack.c.h.b16 %v157
  %v581 = vunpack.c.l.b16 %v158
  %v582 = vunpack.c.h.b16 %v158
  %v583 = vpack.c.b16 %v329, %v327
  %v584 = vpack.c.b16 %v330, %v328
  %v585 = vpack.c.b16 %v333, %v331
  %v586 = vpack.c.b16 %v334, %v332
  %v587 = vpack.c.b16 %v337, %v335
  %v588 = vpack.c.b16 %v338, %v336
  %v589 = vpack.c.b16 %v341, %v339
  %v590 = vpack.c.b16 %v342, %v340
  %v591 = vpack.c.b16 %v345, %v343
  %v592 = vpack.c.b16 %v346, %v344
  %v593 = vpack.c.b16 %v349, %v347
  %v594 = vpack.c.b16 %v350, %v348
  %v595 = vpack.c.b16 %v353, %v351
  %v596 = vpack.c.b16 %v354, %v352
  %v597 = vpack.c.b16 %v357, %v355
  %v598 = vpack.c.b16 %v358, %v356
  %v599 = vpack.c.b16 %v361, %v359
  %v600 = vpack.c.b16 %v362, %v360
  %v601 = vpack.c.b16 %v365, %v363
  %v602 = vpack.c.b16 %v366, %v364
  %v603 = vpack.c.b16 %v369, %v367
  %v604 = vpack.c.b16 %v370, %v368
  %v605 = vpack.c.b16 %v373, %v371
  %v606 = vpack.c.b16 %v374, %v372
  %v607 = vpack.c.b16 %v377, %v375
  %v608 = vpack.c.b16 %v378, %v376
  %v609 = vpack.c.b16 %v381, %v379
  %v610 = vpack.c.b16 %v382, %v380
  %v611 = vpack.c.b16 %v385, %v383
  %v612 = vpack.c.b16 %v386, %v384
  %v613 = vpack.c.b16 %v389, %v387
  %v614 = vpack.c.b16 %v390, %v388
  %v615 = vpack.c.b16 %v393, %v391
  %v616 = vpack.c.b16 %v394, %v392
  %v617 = vpack.c.b16 %v397, %v395
  %v618 = vpack.c.b16 %v398, %v396
  %v619 = vpack.c.b16 %v401, %v399
  %v620 = vpack.c.b16 %v402, %v400
  %v621 = vpack.c.b16 %v405, %v403
  %v622 = vpack.c.b16 %v406, %v404
  %v623 = vpack.c.b16 %v409, %v407
  %v624 = vpack.c.b16 %v410, %v408
  %v625 = vpack.c.b16 %v413, %v411
  %v626 = vpack.c.b16 %v414, %v412
  %v627 = vpack.c.b16 %v417, %v415
  %v628 = vpack.c.b16 %v418, %v416
  %v629 = vpack.c.b16 %v421, %v419
  %v630 = vpack.c.b16 %v422, %v420
  %v631 = vpack.c.b16 %v425, %v423
  %v632 = vpack.c.b16 %v426, %v424
  %v633 = vpack.c.b16 %v429, %v427
  %v634 = vpack.c.b16 %v430, %v428
  %v635 = vpack.c.b16 %v433, %v431
  %v636 = vpack.c.b16 %v434, %v432
  %v637 = vpack.c.b16 %v437, %v435
  %v638 = vpack.c.b16 %v438, %v436
  %v639 = vpack.c.b16 %v441, %v439
  %v640 = vpack.c.b16 %v442, %v440
  %v641 = vpack.c.b16 %v445, %v443
  %v642 = vpack.c.b16 %v446, %v444
  %v643 = vpack.c.b16 %v449, %v447
  %v644 = vpack.c.b16 %v450, %v448
  %v645 = vpack.c.b16 %v453, %v451
  %v646 = vpack.c.b16 %v454, %v452
  %v647 = vpack.c.b16 %v457, %v455
  %v648 = vpack.c.b16 %v458, %v456
  %v649 = vpack.c.b16 %v461, %v459
  %v650 = vpack.c.b16 %v462, %v460
  %v651 = vpack.c.b16 %v465, %v463
  %v652 = vpack.c.b16 %v466, %v464
  %v653 = vpack.c.b16 %v469, %v467
  %v654 = vpack.c.b16 %v470, %v468
  %v655 = vpack.c.b16 %v473, %v471
  %v656 = vpack.c.b16 %v474, %v472
  %v657 = vpack.c.b16 %v477, %v475
  %v658 = vpack.c.b16 %v478, %v476
  %v659 = vpack.c.b16 %v481, %v479
  %v660 = vpack.c.b16 %v482, %v480
  %v661 = vpack.c.b16 %v485, %v483
  %v662 = vpack.c.b16 %v486, %v484
  %v663 = vpack.c.b16 %v489, %v487
  %v664 = vpack.c.b16 %v490, %v488
  %v665 = vpack.c.b16 %v493, %v491
  %v666 = vpack.c.b16 %v494, %v492
  %v667 = vpack.c.b16 %v497, %v495
  %v668 = vpack.c.b16 %v498, %v496
  %v669 = vpack.c.b16 %v501, %v499
  %v670 = vpack.c.b16 %v502, %v500
  %v671 = vpack.c.b16 %v505, %v503
  %v672 = vpack.c.b16 %v506, %v504
  %v673 = vpack.c.b16 %v509, %v507
  %v674 = vpack.c.b16 %v510, %v508
  %v675 = vpack.c.b16 %v513, %v511
  %v676 = vpack.c.b16 %v514, %v512
  %v677 = vpack.c.b16 %v517, %v515
  %v678 = vpack.c.b16 %v518, %v516
  %v679 = vpack.c.b16 %v521, %v519
  %v680 = vpack.c.b16 %v522, %v520
  %v681 = vpack.c.b16 %v525, %v523
  %v682 = vpack.c.b16 %v526, %v524
  %v683 = vpack.c.b16 %v529, %v527
  %v684 = vpack.c.b16 %v530, %v528
  %v685 = vpack.c.b16 %v533, %v531
  %v686 = vpack.c.b16 %v534, %v532
  %v687 = vpack.c.b16 %v537, %v535
  %v688 = vpack.c.b16 %v538, %v536
  %v689 = vpack.c.b16 %v541, %v539
  %v690 = vpack.c.b16 %v542, %v540
  %v691 = vpack.c.b16 %v545, %v543
  %v692 = vpack.c.b16 %v546, %v544
  %v693 = vpack.c.b16 %v549, %v547
  %v694 = vpack.c.b16 %v550, %v548
  %v695 = vpack.c.b16 %v553, %v551
  %v696 = vpack.c.b16 %v554, %v552
  %v697 = vpack.c.b16 %v557, %v555
  %v698 = vpack.c.b16 %v558, %v556
  %v699 = vpack.c.b16 %v561, %v559
  %v700 = vpack.c.b16 %v562, %v560
  %v701 = vpack.c.b16 %v565, %v563
  %v702 = vpack.c.b16 %v566, %v564
  %v703 = vpack.c.b16 %v569, %v567
  %v704 = vpack.c.b16 %v570, %v568
  %v705 = vpack.c.b16 %v573, %v571
  %v706 = vpack.c.b16 %v574, %v572
  %v707 = vpack.c.b16 %v577, %v575
  %v708 = vpack.c.b16 %v578, %v576
  %v709 = vpack.c.b16 %v581, %v579
  %v710 = vpack.c.b16 %v582, %v580
  %839 = vmatprep.subr.bf16.mxu0 %v584
  %840 = vmatpush1.bf16.msra.mxu0 %v583
  %841 = vmatprep.subr.bf16.mxu0 %v586
  %842 = vmatpush1.bf16.msra.mxu0 %v585
  %843 = vmatprep.subr.bf16.mxu0 %v588
  %844 = vmatpush1.bf16.msra.mxu0 %v587
  %845 = vmatprep.subr.bf16.mxu0 %v590
  %846 = vmatpush1.bf16.msra.mxu0 %v589
  %847 = vmatprep.subr.bf16.mxu0 %v592
  %848 = vmatpush1.bf16.msra.mxu0 %v591
  %849 = vmatprep.subr.bf16.mxu0 %v594
  %850 = vmatpush1.bf16.msra.mxu0 %v593
  %851 = vmatprep.subr.bf16.mxu0 %v596
  %852 = vmatpush1.bf16.msra.mxu0 %v595
  %853 = vmatprep.subr.bf16.mxu0 %v598
  %854 = vmatpush1.bf16.msra.mxu0 %v597
  %855 = vmatprep.subr.bf16.mxu0 %v600
  %856 = vmatpush1.bf16.msra.mxu0 %v599
  %857 = vmatprep.subr.bf16.mxu0 %v602
  %858 = vmatpush1.bf16.msra.mxu0 %v601
  %859 = vmatprep.subr.bf16.mxu0 %v604
  %860 = vmatpush1.bf16.msra.mxu0 %v603
  %861 = vmatprep.subr.bf16.mxu0 %v606
  %862 = vmatpush1.bf16.msra.mxu0 %v605
  %863 = vmatprep.subr.bf16.mxu0 %v608
  %864 = vmatpush1.bf16.msra.mxu0 %v607
  %865 = vmatprep.subr.bf16.mxu0 %v610
  %866 = vmatpush1.bf16.msra.mxu0 %v609
  %867 = vmatprep.subr.bf16.mxu0 %v612
  %868 = vmatpush1.bf16.msra.mxu0 %v611
  %869 = vmatprep.subr.bf16.mxu0 %v614
  %870 = vmatpush1.bf16.msra.mxu0 %v613
  %871 = vmatprep.mubr.bf16.mxu0 %v184
  %872 = vmatmul.mubr.bf16.gmra.mrb[0].mxu0 %v183
  %v873 = vpop.f32.mrb[0].mxu0
  %v874 = vadd.f32 %v164, %v873
  %v875 = vpop.f32.mrb[0].mxu0
  %v876 = vadd.f32 %v168, %v875
  %v877 = vpop.f32.mrb[0].mxu0
  %v878 = vpop.f32.mrb[0].mxu0
  %879 = vdwg.mxu0
  %880 = vmatprep.subr.bf16.mxu0 %v616
  %881 = vmatpush1.bf16.msra.mxu0 %v615
  %882 = vmatprep.subr.bf16.mxu0 %v618
  %883 = vmatpush1.bf16.msra.mxu0 %v617
  %884 = vmatprep.subr.bf16.mxu0 %v620
  %885 = vmatpush1.bf16.msra.mxu0 %v619
  %886 = vmatprep.subr.bf16.mxu0 %v622
  %887 = vmatpush1.bf16.msra.mxu0 %v621
  %888 = vmatprep.subr.bf16.mxu0 %v624
  %889 = vmatpush1.bf16.msra.mxu0 %v623
  %890 = vmatprep.subr.bf16.mxu0 %v626
  %891 = vmatpush1.bf16.msra.mxu0 %v625
  %892 = vmatprep.subr.bf16.mxu0 %v628
  %893 = vmatpush1.bf16.msra.mxu0 %v627
  %894 = vmatprep.subr.bf16.mxu0 %v630
  %895 = vmatpush1.bf16.msra.mxu0 %v629
  %896 = vmatprep.subr.bf16.mxu0 %v632
  %897 = vmatpush1.bf16.msra.mxu0 %v631
  %898 = vmatprep.subr.bf16.mxu0 %v634
  %899 = vmatpush1.bf16.msra.mxu0 %v633
  %900 = vmatprep.subr.bf16.mxu0 %v636
  %901 = vmatpush1.bf16.msra.mxu0 %v635
  %902 = vmatprep.subr.bf16.mxu0 %v638
  %903 = vmatpush1.bf16.msra.mxu0 %v637
  %904 = vmatprep.subr.bf16.mxu0 %v640
  %905 = vmatpush1.bf16.msra.mxu0 %v639
  %906 = vmatprep.subr.bf16.mxu0 %v642
  %907 = vmatpush1.bf16.msra.mxu0 %v641
  %908 = vmatprep.subr.bf16.mxu0 %v644
  %909 = vmatpush1.bf16.msra.mxu0 %v643
  %910 = vmatprep.subr.bf16.mxu0 %v646
  %911 = vmatpush1.bf16.msra.mxu0 %v645
  %912 = vmatprep.mubr.bf16.mxu0 %v186
  %913 = vmatmul.mubr.bf16.gmra.mrb[0].mxu0 %v185
  %v914 = vpop.f32.mrb[0].mxu0
  %v915 = vadd.f32 %v874, %v914
  %v916 = vpop.f32.mrb[0].mxu0
  %v917 = vadd.f32 %v876, %v916
  %v918 = vpop.f32.mrb[0].mxu0
  %v919 = vpop.f32.mrb[0].mxu0
  %920 = vdwg.mxu0
  %921 = vmatprep.subr.bf16.mxu0 %v648
  %922 = vmatpush1.bf16.msra.mxu0 %v647
  %923 = vmatprep.subr.bf16.mxu0 %v650
  %924 = vmatpush1.bf16.msra.mxu0 %v649
  %925 = vmatprep.subr.bf16.mxu0 %v652
  %926 = vmatpush1.bf16.msra.mxu0 %v651
  %927 = vmatprep.subr.bf16.mxu0 %v654
  %928 = vmatpush1.bf16.msra.mxu0 %v653
  %929 = vmatprep.subr.bf16.mxu0 %v656
  %930 = vmatpush1.bf16.msra.mxu0 %v655
  %931 = vmatprep.subr.bf16.mxu0 %v658
  %932 = vmatpush1.bf16.msra.mxu0 %v657
  %933 = vmatprep.subr.bf16.mxu0 %v660
  %934 = vmatpush1.bf16.msra.mxu0 %v659
  %935 = vmatprep.subr.bf16.mxu0 %v662
  %936 = vmatpush1.bf16.msra.mxu0 %v661
  %937 = vmatprep.subr.bf16.mxu0 %v664
  %938 = vmatpush1.bf16.msra.mxu0 %v663
  %939 = vmatprep.subr.bf16.mxu0 %v666
  %940 = vmatpush1.bf16.msra.mxu0 %v665
  %941 = vmatprep.subr.bf16.mxu0 %v668
  %942 = vmatpush1.bf16.msra.mxu0 %v667
  %943 = vmatprep.subr.bf16.mxu0 %v670
  %944 = vmatpush1.bf16.msra.mxu0 %v669
  %945 = vmatprep.subr.bf16.mxu0 %v672
  %946 = vmatpush1.bf16.msra.mxu0 %v671
  %947 = vmatprep.subr.bf16.mxu0 %v674
  %948 = vmatpush1.bf16.msra.mxu0 %v673
  %949 = vmatprep.subr.bf16.mxu0 %v676
  %950 = vmatpush1.bf16.msra.mxu0 %v675
  %951 = vmatprep.subr.bf16.mxu0 %v678
  %952 = vmatpush1.bf16.msra.mxu0 %v677
  %953 = vmatprep.mubr.bf16.mxu0 %v188
  %954 = vmatmul.mubr.bf16.gmra.mrb[0].mxu0 %v187
  %v955 = vpop.f32.mrb[0].mxu0
  %v956 = vadd.f32 %v915, %v955
  %v957 = vpop.f32.mrb[0].mxu0
  %v958 = vadd.f32 %v917, %v957
  %v959 = vpop.f32.mrb[0].mxu0
  %v960 = vpop.f32.mrb[0].mxu0
  %961 = vdwg.mxu0
  %962 = vmatprep.subr.bf16.mxu0 %v680
  %963 = vmatpush1.bf16.msra.mxu0 %v679
  %964 = vmatprep.subr.bf16.mxu0 %v682
  %965 = vmatpush1.bf16.msra.mxu0 %v681
  %966 = vmatprep.subr.bf16.mxu0 %v684
  %967 = vmatpush1.bf16.msra.mxu0 %v683
  %968 = vmatprep.subr.bf16.mxu0 %v686
  %969 = vmatpush1.bf16.msra.mxu0 %v685
  %970 = vmatprep.subr.bf16.mxu0 %v688
  %971 = vmatpush1.bf16.msra.mxu0 %v687
  %972 = vmatprep.subr.bf16.mxu0 %v690
  %973 = vmatpush1.bf16.msra.mxu0 %v689
  %974 = vmatprep.subr.bf16.mxu0 %v692
  %975 = vmatpush1.bf16.msra.mxu0 %v691
  %976 = vmatprep.subr.bf16.mxu0 %v694
  %977 = vmatpush1.bf16.msra.mxu0 %v693
  %978 = vmatprep.subr.bf16.mxu0 %v696
  %979 = vmatpush1.bf16.msra.mxu0 %v695
  %980 = vmatprep.subr.bf16.mxu0 %v698
  %981 = vmatpush1.bf16.msra.mxu0 %v697
  %982 = vmatprep.subr.bf16.mxu0 %v700
  %983 = vmatpush1.bf16.msra.mxu0 %v699
  %984 = vmatprep.subr.bf16.mxu0 %v702
  %985 = vmatpush1.bf16.msra.mxu0 %v701
  %986 = vmatprep.subr.bf16.mxu0 %v704
  %987 = vmatpush1.bf16.msra.mxu0 %v703
  %988 = vmatprep.subr.bf16.mxu0 %v706
  %989 = vmatpush1.bf16.msra.mxu0 %v705
  %990 = vmatprep.subr.bf16.mxu0 %v708
  %991 = vmatpush1.bf16.msra.mxu0 %v707
  %992 = vmatprep.subr.bf16.mxu0 %v710
  %993 = vmatpush1.bf16.msra.mxu0 %v709
  %994 = vmatprep.mubr.bf16.mxu0 %v190
  %995 = vmatmul.mubr.bf16.gmra.mrb[0].mxu0 %v189
  %v996 = vpop.f32.mrb[0].mxu0
  %v997 = vadd.f32 %v956, %v996
  %v998 = vpop.f32.mrb[0].mxu0
  %v999 = vadd.f32 %v958, %v998
  %v1000 = vpop.f32.mrb[0].mxu0
  %v1001 = vpop.f32.mrb[0].mxu0
  %1002 = vdwg.mxu0
  %v1003 = vmax.f32 %v997, 0.0
  %v1004 = vmax.f32 %v999, 0.0
  %v1005 = vpack.c.bf16 %v1003, %v1003
  %v1006 = vpack.c.bf16 %v1004, %v1004
  %v1007 = vld [vmem:[%s3] sm:$0xf]
  %v1008 = vld [vmem:[%s3 + $0x4] sm:$0xf]
  %v1009 = vld [vmem:[%s3 + $0x8] sm:$0xf]
  %v1010 = vld [vmem:[%s3 + $0xc] sm:$0xf]
  %v1011 = vld [vmem:[%s3 + $0x10] sm:$0xf]
  %v1012 = vld [vmem:[%s3 + $0x14] sm:$0xf]
  %v1013 = vld [vmem:[%s3 + $0x18] sm:$0xf]
  %v1014 = vld [vmem:[%s3 + $0x1c] sm:$0xf]
  %v1015 = vld [vmem:[%s3 + $0x20] sm:$0xf]
  %v1016 = vld [vmem:[%s3 + $0x24] sm:$0xf]
  %v1017 = vld [vmem:[%s3 + $0x28] sm:$0xf]
  %v1018 = vld [vmem:[%s3 + $0x2c] sm:$0xf]
  %v1019 = vld [vmem:[%s3 + $0x30] sm:$0xf]
  %v1020 = vld [vmem:[%s3 + $0x34] sm:$0xf]
  %v1021 = vld [vmem:[%s3 + $0x38] sm:$0xf]
  %v1022 = vld [vmem:[%s3 + $0x3c] sm:$0xf]
  %v1023 = vld [vmem:[%s3 + $0x40] sm:$0xf]
  %v1024 = vld [vmem:[%s3 + $0x44] sm:$0xf]
  %v1025 = vld [vmem:[%s3 + $0x48] sm:$0xf]
  %v1026 = vld [vmem:[%s3 + $0x4c] sm:$0xf]
  %v1027 = vld [vmem:[%s3 + $0x50] sm:$0xf]
  %v1028 = vld [vmem:[%s3 + $0x54] sm:$0xf]
  %v1029 = vld [vmem:[%s3 + $0x58] sm:$0xf]
  %v1030 = vld [vmem:[%s3 + $0x5c] sm:$0xf]
  %v1031 = vld [vmem:[%s3 + $0x60] sm:$0xf]
  %v1032 = vld [vmem:[%s3 + $0x64] sm:$0xf]
  %v1033 = vld [vmem:[%s3 + $0x68] sm:$0xf]
  %v1034 = vld [vmem:[%s3 + $0x6c] sm:$0xf]
  %v1035 = vld [vmem:[%s3 + $0x70] sm:$0xf]
  %v1036 = vld [vmem:[%s3 + $0x74] sm:$0xf]
  %v1037 = vld [vmem:[%s3 + $0x78] sm:$0xf]
  %v1038 = vld [vmem:[%s3 + $0x7c] sm:$0xf]
  %v1039 = vld [vmem:[%s4] sm:$0x1]
  %v1041 = vlaneseq
  %v1042 = vshrl.u32 %v1041, 7
  %v1043 = vsub.s32 0, %v1042
  %v1044 = vrot.slane %v1039, %v1043
  %v1078 = vunpack.c.l.b16 %v1007
  %v1079 = vunpack.c.l.b16 %v1008
  %v1080 = vunpack.c.l.b16 %v1009
  %v1081 = vunpack.c.l.b16 %v1010
  %v1082 = vunpack.c.l.b16 %v1011
  %v1083 = vunpack.c.l.b16 %v1012
  %v1084 = vunpack.c.l.b16 %v1013
  %v1085 = vunpack.c.l.b16 %v1014
  %v1086 = vunpack.c.l.b16 %v1015
  %v1087 = vunpack.c.l.b16 %v1016
  %v1088 = vunpack.c.l.b16 %v1017
  %v1089 = vunpack.c.l.b16 %v1018
  %v1090 = vunpack.c.l.b16 %v1019
  %v1091 = vunpack.c.l.b16 %v1020
  %v1092 = vunpack.c.l.b16 %v1021
  %v1093 = vunpack.c.l.b16 %v1022
  %v1094 = vunpack.c.l.b16 %v1023
  %v1095 = vunpack.c.l.b16 %v1024
  %v1096 = vunpack.c.l.b16 %v1025
  %v1097 = vunpack.c.l.b16 %v1026
  %v1098 = vunpack.c.l.b16 %v1027
  %v1099 = vunpack.c.l.b16 %v1028
  %v1100 = vunpack.c.l.b16 %v1029
  %v1101 = vunpack.c.l.b16 %v1030
  %v1102 = vunpack.c.l.b16 %v1031
  %v1103 = vunpack.c.l.b16 %v1032
  %v1104 = vunpack.c.l.b16 %v1033
  %v1105 = vunpack.c.l.b16 %v1034
  %v1106 = vunpack.c.l.b16 %v1035
  %v1107 = vunpack.c.l.b16 %v1036
  %v1108 = vunpack.c.l.b16 %v1037
  %v1109 = vunpack.c.l.b16 %v1038
  %v1110 = vpack.c.b16 %v1079, %v1078
  %v1111 = vpack.c.b16 %v1081, %v1080
  %v1112 = vpack.c.b16 %v1083, %v1082
  %v1113 = vpack.c.b16 %v1085, %v1084
  %v1114 = vpack.c.b16 %v1087, %v1086
  %v1115 = vpack.c.b16 %v1089, %v1088
  %v1116 = vpack.c.b16 %v1091, %v1090
  %v1117 = vpack.c.b16 %v1093, %v1092
  %v1118 = vpack.c.b16 %v1095, %v1094
  %v1119 = vpack.c.b16 %v1097, %v1096
  %v1120 = vpack.c.b16 %v1099, %v1098
  %v1121 = vpack.c.b16 %v1101, %v1100
  %v1122 = vpack.c.b16 %v1103, %v1102
  %v1123 = vpack.c.b16 %v1105, %v1104
  %v1124 = vpack.c.b16 %v1107, %v1106
  %v1125 = vpack.c.b16 %v1109, %v1108
  %1142 = vmatprep.subr.bf16.mxu0 0
  %1143 = vmatpush1.bf16.msra.mxu0 %v1110
  %1144 = vmatprep.subr.bf16.mxu0 0
  %1145 = vmatpush1.bf16.msra.mxu0 %v1111
  %1146 = vmatprep.subr.bf16.mxu0 0
  %1147 = vmatpush1.bf16.msra.mxu0 %v1112
  %1148 = vmatprep.subr.bf16.mxu0 0
  %1149 = vmatpush1.bf16.msra.mxu0 %v1113
  %1150 = vmatprep.subr.bf16.mxu0 0
  %1151 = vmatpush1.bf16.msra.mxu0 %v1114
  %1152 = vmatprep.subr.bf16.mxu0 0
  %1153 = vmatpush1.bf16.msra.mxu0 %v1115
  %1154 = vmatprep.subr.bf16.mxu0 0
  %1155 = vmatpush1.bf16.msra.mxu0 %v1116
  %1156 = vmatprep.subr.bf16.mxu0 0
  %1157 = vmatpush1.bf16.msra.mxu0 %v1117
  %1158 = vmatprep.subr.bf16.mxu0 0
  %1159 = vmatpush1.bf16.msra.mxu0 %v1118
  %1160 = vmatprep.subr.bf16.mxu0 0
  %1161 = vmatpush1.bf16.msra.mxu0 %v1119
  %1162 = vmatprep.subr.bf16.mxu0 0
  %1163 = vmatpush1.bf16.msra.mxu0 %v1120
  %1164 = vmatprep.subr.bf16.mxu0 0
  %1165 = vmatpush1.bf16.msra.mxu0 %v1121
  %1166 = vmatprep.subr.bf16.mxu0 0
  %1167 = vmatpush1.bf16.msra.mxu0 %v1122
  %1168 = vmatprep.subr.bf16.mxu0 0
  %1169 = vmatpush1.bf16.msra.mxu0 %v1123
  %1170 = vmatprep.subr.bf16.mxu0 0
  %1171 = vmatpush1.bf16.msra.mxu0 %v1124
  %1172 = vmatprep.subr.bf16.mxu0 0
  %1173 = vmatpush1.bf16.msra.mxu0 %v1125
  %1174 = vmatprep.mubr.bf16.mxu0 %v1006
  %1175 = vmatmul.mubr.bf16.gmra.mrb[0].mxu0 %v1005
  %v1176 = vpop.f32.mrb[0].mxu0
  %v1177 = vadd.f32 %v1044, %v1176
  %v1178 = vpop.f32.mrb[0].mxu0
  %v1179 = vpop.f32.mrb[0].mxu0
  %v1180 = vpop.f32.mrb[0].mxu0
  %1181 = vdwg.mxu0
  %v1182 = vmax.f32 %v1177, 0.0
  %v1183 = vpack.c.bf16 %v1182, %v1182
  %v1184 = vld [vmem:[%s5] sm:$0xf]
  %v1185 = vld [vmem:[%s5 + $0x4] sm:$0xf]
  %v1186 = vld [vmem:[%s5 + $0x8] sm:$0xf]
  %v1187 = vld [vmem:[%s5 + $0xc] sm:$0xf]
  %v1188 = vld [vmem:[%s5 + $0x10] sm:$0xf]
  %v1189 = vld [vmem:[%s5 + $0x14] sm:$0xf]
  %v1190 = vld [vmem:[%s5 + $0x18] sm:$0xf]
  %v1191 = vld [vmem:[%s5 + $0x1c] sm:$0xf]
  %v1192 = vld [vmem:[%s5 + $0x20] sm:$0xf]
  %v1193 = vld [vmem:[%s5 + $0x24] sm:$0xf]
  %v1194 = vld [vmem:[%s5 + $0x28] sm:$0xf]
  %v1195 = vld [vmem:[%s5 + $0x2c] sm:$0xf]
  %v1196 = vld [vmem:[%s5 + $0x30] sm:$0xf]
  %v1197 = vld [vmem:[%s5 + $0x34] sm:$0xf]
  %v1198 = vld [vmem:[%s5 + $0x38] sm:$0xf]
  %v1199 = vld [vmem:[%s5 + $0x3c] sm:$0xf]
  %v1200 = vld [vmem:[%s6] sm:$0x1]
  %v1202 = vlaneseq
  %v1203 = vshrl.u32 %v1202, 7
  %v1204 = vsub.s32 0, %v1203
  %v1205 = vrot.slane %v1200, %v1204
  %v1223 = vunpack.c.l.b16 %v1184
  %v1224 = vunpack.c.l.b16 %v1185
  %v1225 = vunpack.c.l.b16 %v1186
  %v1226 = vunpack.c.l.b16 %v1187
  %v1227 = vunpack.c.l.b16 %v1188
  %v1228 = vunpack.c.l.b16 %v1189
  %v1229 = vunpack.c.l.b16 %v1190
  %v1230 = vunpack.c.l.b16 %v1191
  %v1231 = vunpack.c.l.b16 %v1192
  %v1232 = vunpack.c.l.b16 %v1193
  %v1233 = vunpack.c.l.b16 %v1194
  %v1234 = vunpack.c.l.b16 %v1195
  %v1235 = vunpack.c.l.b16 %v1196
  %v1236 = vunpack.c.l.b16 %v1197
  %v1237 = vunpack.c.l.b16 %v1198
  %v1238 = vunpack.c.l.b16 %v1199
  %v1239 = vpack.c.b16 %v1224, %v1223
  %v1240 = vpack.c.b16 %v1226, %v1225
  %v1241 = vpack.c.b16 %v1228, %v1227
  %v1242 = vpack.c.b16 %v1230, %v1229
  %v1243 = vpack.c.b16 %v1232, %v1231
  %v1244 = vpack.c.b16 %v1234, %v1233
  %v1245 = vpack.c.b16 %v1236, %v1235
  %v1246 = vpack.c.b16 %v1238, %v1237
  %1255 = vmatprep.subr.bf16.mxu0 0
  %1256 = vmatpush1.bf16.msra.mxu0 %v1239
  %1257 = vmatprep.subr.bf16.mxu0 0
  %1258 = vmatpush1.bf16.msra.mxu0 %v1240
  %1259 = vmatprep.subr.bf16.mxu0 0
  %1260 = vmatpush1.bf16.msra.mxu0 %v1241
  %1261 = vmatprep.subr.bf16.mxu0 0
  %1262 = vmatpush1.bf16.msra.mxu0 %v1242
  %1263 = vmatprep.subr.bf16.mxu0 0
  %1264 = vmatpush1.bf16.msra.mxu0 %v1243
  %1265 = vmatprep.subr.bf16.mxu0 0
  %1266 = vmatpush1.bf16.msra.mxu0 %v1244
  %1267 = vmatprep.subr.bf16.mxu0 0
  %1268 = vmatpush1.bf16.msra.mxu0 %v1245
  %1269 = vmatprep.subr.bf16.mxu0 0
  %1270 = vmatpush1.bf16.msra.mxu0 %v1246
  %1271 = vmatprep.subr.bf16.mxu0 0
  %1272 = vmatpush1.bf16.msra.mxu0 0
  %1273 = vmatprep.subr.bf16.mxu0 0
  %1274 = vmatpush1.bf16.msra.mxu0 0
  %1275 = vmatprep.subr.bf16.mxu0 0
  %1276 = vmatpush1.bf16.msra.mxu0 0
  %1277 = vmatprep.subr.bf16.mxu0 0
  %1278 = vmatpush1.bf16.msra.mxu0 0
  %1279 = vmatprep.subr.bf16.mxu0 0
  %1280 = vmatpush1.bf16.msra.mxu0 0
  %1281 = vmatprep.subr.bf16.mxu0 0
  %1282 = vmatpush1.bf16.msra.mxu0 0
  %1283 = vmatprep.subr.bf16.mxu0 0
  %1284 = vmatpush1.bf16.msra.mxu0 0
  %1285 = vmatprep.subr.bf16.mxu0 0
  %1286 = vmatpush1.bf16.msra.mxu0 0
  %1287 = vmatprep.mubr.bf16.mxu0 0
  %1288 = vmatmul.mubr.bf16.gmra.mrb[0].mxu0 %v1183
  %v1289 = vpop.f32.mrb[0].mxu0
  %v1290 = vadd.f32 %v1205, %v1289
  %v1291 = vpop.f32.mrb[0].mxu0
  %v1292 = vpop.f32.mrb[0].mxu0
  %v1293 = vpop.f32.mrb[0].mxu0
  %1294 = vdwg.mxu0
  %1295 = vst [vmem:[%s7] sm:$0xff] %v1290
  // Predicated region
  $region30: #{simple_dl_model_forward.1} parent=0 // pred_check
    _
  $region31: #{simple_dl_model_forward.1} parent=0 // pred_check_branch
    %1297 = sbr.rel (0) target = $region33
  $region32: #{simple_dl_model_forward.1} parent=0 // pred_region
    _
  $region33: #{simple_dl_model_forward.1} parent=0 // pred_fallthru
    _
  // Predicated region
  $region34: #{simple_dl_model_forward.1} parent=0 // pred_check
    _
  $region35: #{simple_dl_model_forward.1} parent=0 // pred_check_branch
    %1299 = sbr.rel (0) target = $region37
  $region36: #{simple_dl_model_forward.1} parent=0 // pred_region
    _
  $region37: #{simple_dl_model_forward.1} parent=0 // pred_fallthru
    _

</llo_original>
